<compile_context>
chip_gen: v6e
topology: v6e:2x2x1
jax: 0.10.0
libtpu: 0.0.40
codegen_flags: <defaults>
</compile_context>

<pallas_src>
import jax
import jax.numpy as jnp
from jax.experimental import pallas as pl
from jax.experimental.pallas import tpu as pltpu

IC, OC, K = 3, 49, 3          # ConvTranspose2d(3, 49, 3, stride=1)
KKIC = IC * K * K             # 27 contraction width
KD_PAD = 32                   # contraction padded to a sublane multiple
OC_PAD = 128                  # output channels padded to one full lane width
GATE_LO = (1 * K + 1) * IC    # 12: start of the center tap (kh=1, kw=1)
GATE_HI = GATE_LO + IC        # 15
TM_MAX = 2048                 # rows of M per grid step


def _fused_convt_kernel(patches_ref, w_ref, b_ref, out_ref):
    """patches: (TM, 32)  w: (32, 128)  b: (1, 128)  out: (TM, 128)

        v1 = patches @ w + b                         # conv-transpose (im2col)
        gate = mean_c relu(center tap of patch)      # repaired gate broadcast
        v2 = v1 * gate
        out = where(v2 < 5, v2, 0)                   # v2 * (v2 < 5)
    """
    p = patches_ref[...]                                              # (TM, 32)
    v1 = jnp.dot(p, w_ref[...], preferred_element_type=jnp.float32)
    v1 = v1 + b_ref[...]                                              # (TM, 128)

    center = p[:, GATE_LO:GATE_HI]                                    # (TM, IC)
    gate = jnp.sum(jnp.maximum(center, 0.0), axis=-1, keepdims=True) * (1.0 / IC)

    v2 = v1 * gate
    out_ref[...] = jnp.where(v2 < 5.0, v2, 0.0).astype(out_ref.dtype)


def _round_up(x, m):
    return (x + m - 1) // m * m


@jax.jit
def model_forward(x, w, b):
    """x: (N, IC, H, W) f32;  w: (IC, OC, K, K);  b: (OC,) -> (N, OC, H+2, W+2)."""
    N, C, H, W = x.shape
    assert C == IC
    OH, OW = H + K - 1, W + K - 1
    M = N * OH * OW

    # ---- im2col built directly in (N, OH, OW, kh*kw*ic) order (no 5-D transpose)
    x_nhwc = jnp.transpose(x, (0, 2, 3, 1))                            # (N, H, W, IC)
    xp = jnp.pad(x_nhwc, ((0, 0), (K - 1, K - 1), (K - 1, K - 1), (0, 0)))
    cols = [xp[:, kh:kh + OH, kw:kw + OW, :] for kh in range(K) for kw in range(K)]
    patches = jnp.concatenate(cols, axis=-1).reshape(M, KKIC).astype(jnp.float32)

    # ---- M tiling (pad rows so the grid divides evenly; padded rows give 0s)
    if M <= TM_MAX:
        tm = _round_up(M, 8)
        m_pad = tm
    else:
        tm = TM_MAX
        m_pad = _round_up(M, tm)
    patches = jnp.pad(patches, ((0, m_pad - M), (0, KD_PAD - KKIC)))

    # ---- weights: flipped kernel in (kh, kw, ic) x oc layout, zero-padded
    w_flip = w[:, :, ::-1, ::-1]                                       # (IC, OC, K, K)
    w_mat = jnp.transpose(w_flip, (2, 3, 0, 1)).reshape(KKIC, OC)
    w_mat = jnp.pad(w_mat.astype(jnp.float32),
                    ((0, KD_PAD - KKIC), (0, OC_PAD - OC)))
    b_row = jnp.pad(b.astype(jnp.float32), (0, OC_PAD - OC)).reshape(1, OC_PAD)

    grid = (m_pad // tm,)
    out_flat = pl.pallas_call(
        _fused_convt_kernel,
        out_shape=jax.ShapeDtypeStruct((m_pad, OC_PAD), jnp.float32),
        grid=grid,
        in_specs=[
            pl.BlockSpec((tm, KD_PAD), lambda i: (i, 0)),     # streamed over M
            pl.BlockSpec((KD_PAD, OC_PAD), lambda i: (0, 0)),  # resident weights
            pl.BlockSpec((1, OC_PAD), lambda i: (0, 0)),       # resident bias
        ],
        out_specs=pl.BlockSpec((tm, OC_PAD), lambda i: (i, 0)),
        compiler_params=pltpu.CompilerParams(
            dimension_semantics=("parallel",),
            vmem_limit_bytes=32 * 1024 * 1024,
        ),
    )(patches, w_mat, b_row)

    out = out_flat[:M, :OC].reshape(N, OH, OW, OC)
    return jnp.transpose(out, (0, 3, 1, 2))                            # NCHW


if __name__ == "__main__":
    key = jax.random.PRNGKey(0)
    kx, kw, kb = jax.random.split(key, 3)

    # small shapes consistent with the module: x2 ~ (batch, 3, 8, 8)
    x2 = jax.random.normal(kx, (2, IC, 8, 8), dtype=jnp.float32)

    # deterministic ConvTranspose2d-style init (uniform(-1/sqrt(fan), 1/sqrt(fan)))
    bound = 1.0 / (IC * K * K) ** 0.5
    w = jax.random.uniform(kw, (IC, OC, K, K), minval=-bound, maxval=bound,
                           dtype=jnp.float32)
    b = jax.random.uniform(kb, (OC,), minval=-bound, maxval=bound,
                           dtype=jnp.float32)

    out = model_forward(x2, w, b)
    jax.block_until_ready(out)
    assert out.shape == (2, OC, 10, 10), out.shape
    assert bool(jnp.all(jnp.isfinite(out)))
    print("KERNEL_OK")
</pallas_src>

<mosaic_0001>
module attributes {stable_mosaic.version = 11 : i64} {
  func.func @_fused_convt_kernel(%arg0: i32, %arg1: memref<200x32xf32, #tpu.memory_space<vmem>>, %arg2: memref<32x128xf32, #tpu.memory_space<vmem>>, %arg3: memref<1x128xf32, #tpu.memory_space<vmem>>, %arg4: memref<200x128xf32, #tpu.memory_space<vmem>>) attributes {dimension_semantics = [#tpu.dimension_semantics<parallel>], iteration_bounds = array<i64: 1>, scalar_prefetch = 0 : i64, scratch_operands = 0 : i64, tpu.core_type = #tpu.core_type<tc>, window_params = [{transform_indices = @transform_0, window_bounds = array<i64: 200, 32>}, {pipeline_mode = #tpu.pipeline_mode<synchronous>, transform_indices = @transform_1, window_bounds = array<i64: 32, 128>}, {pipeline_mode = #tpu.pipeline_mode<synchronous>, transform_indices = @transform_2, window_bounds = array<i64: 1, 128>}, {transform_indices = @transform_3, window_bounds = array<i64: 200, 128>}]} {
    %c0 = arith.constant 0 : index
    %c0_0 = arith.constant 0 : index
    %0 = vector.load %arg1[%c0, %c0_0] : memref<200x32xf32, #tpu.memory_space<vmem>>, vector<200x32xf32>
    %c0_1 = arith.constant 0 : index
    %c0_2 = arith.constant 0 : index
    %1 = vector.load %arg2[%c0_1, %c0_2] : memref<32x128xf32, #tpu.memory_space<vmem>>, vector<32x128xf32>
    %cst = arith.constant dense<0.000000e+00> : vector<200x128xf32>
    %2 = tpu.matmul %0, %1, %cst {dimension_numbers = #tpu.dot_dimension_numbers<[1], [0], [0], [1], [0, 0, 1, 1], [], []>} : vector<200x32xf32>, vector<32x128xf32>, vector<200x128xf32> -> vector<200x128xf32>
    %c0_3 = arith.constant 0 : index
    %c0_4 = arith.constant 0 : index
    %3 = vector.load %arg3[%c0_3, %c0_4] : memref<1x128xf32, #tpu.memory_space<vmem>>, vector<1x128xf32>
    %4 = vector.broadcast %3 : vector<1x128xf32> to vector<200x128xf32>
    %5 = arith.addf %2, %4 : vector<200x128xf32>
    %6 = vector.extract_strided_slice %0 {offsets = [0, 12], sizes = [200, 3], strides = [1, 1]} : vector<200x32xf32> to vector<200x3xf32>
    %cst_5 = arith.constant 0.000000e+00 : f32
    %7 = vector.broadcast %cst_5 : f32 to vector<200x3xf32>
    %8 = arith.maximumf %6, %7 : vector<200x3xf32>
    %cst_6 = arith.constant dense<0.000000e+00> : vector<200xf32>
    %9 = vector.multi_reduction <add>, %8, %cst_6 [1] : vector<200x3xf32> to vector<200xf32>
    %10 = vector.shape_cast %9 : vector<200xf32> to vector<200x1xf32>
    %cst_7 = arith.constant 0.333333343 : f32
    %11 = vector.broadcast %cst_7 : f32 to vector<200x1xf32>
    %12 = arith.mulf %10, %11 : vector<200x1xf32>
    %13 = vector.broadcast %12 : vector<200x1xf32> to vector<200x128xf32>
    %14 = arith.mulf %5, %13 : vector<200x128xf32>
    %cst_8 = arith.constant 5.000000e+00 : f32
    %15 = vector.broadcast %cst_8 : f32 to vector<200x128xf32>
    %16 = arith.cmpf olt, %14, %15 : vector<200x128xf32>
    %cst_9 = arith.constant 0.000000e+00 : f32
    %17 = vector.broadcast %cst_9 : f32 to vector<200x128xf32>
    %18 = arith.select %16, %14, %17 : vector<200x128xi1>, vector<200x128xf32>
    %c0_10 = arith.constant 0 : index
    %c0_11 = arith.constant 0 : index
    %19 = vector.load %arg4[%c0_10, %c0_11] : memref<200x128xf32, #tpu.memory_space<vmem>>, vector<200x128xf32>
    tpu.vector_store %arg4[%c0_10, %c0_11], %18 {strides = array<i32>} : memref<200x128xf32, #tpu.memory_space<vmem>>, vector<200x128xf32>,
    return
  }
  func.func @transform_0(%arg0: i32) -> (i32, i32) {
    %c0_i32 = arith.constant 0 : i32
    %c0_i32_0 = arith.constant 0 : i32
    return %arg0, %c0_i32 : i32, i32
  }
  func.func @transform_1(%arg0: i32) -> (i32, i32) {
    %c0_i32 = arith.constant 0 : i32
    %c0_i32_0 = arith.constant 0 : i32
    %c0_i32_1 = arith.constant 0 : i32
    return %c0_i32, %c0_i32_0 : i32, i32
  }
  func.func @transform_2(%arg0: i32) -> (i32, i32) {
    %c0_i32 = arith.constant 0 : i32
    %c0_i32_0 = arith.constant 0 : i32
    %c0_i32_1 = arith.constant 0 : i32
    return %c0_i32, %c0_i32_0 : i32, i32
  }
  func.func @transform_3(%arg0: i32) -> (i32, i32) {
    %c0_i32 = arith.constant 0 : i32
    %c0_i32_0 = arith.constant 0 : i32
    return %arg0, %c0_i32 : i32, i32
  }
}

</mosaic_0001>

<llo_original>
// kernel: model_forward.1
$region0: #{model_forward.1}
  #allocation0 [shape = 'u32[]', space=smem, size = 0x4, offset = 0x4, fixed_abs, tag = 'smem constant byte address 0x4 - core index']
  #allocation1 [shape = 'u32[144,128]{1,0:T(1,128)}', space=vmem, size = 0x12000, scoped, tag = 'internal scratch']
  %s0 = inlined_call_operand.vmem [shape: f32[200,32], index: 0, kind: input, shape index: {}]
  %s1 = inlined_call_operand.vmem [shape: f32[32,128], index: 1, kind: input, shape index: {}]
  %s2 = inlined_call_operand.vmem [shape: f32[1,128], index: 2, kind: input, shape index: {}]
  %s3 = inlined_call_operand.vmem [shape: f32[200,128], index: 3, kind: output, shape index: {}]
  %s4 = sld [smem:[#allocation0]]
  $region22: #{model_forward.1} parent=0
    _
  %s6 = ssub.s32 1, %s4
  %s7 = scalar_select 0, %s6, %s4
  // Predicated region
  $region2: #{model_forward.1} parent=0 // pred_check
    _
  $region3: #{model_forward.1} parent=0 // pred_check_branch
    %9 = sbr.rel (0) target = $region5
  $region4: #{model_forward.1} parent=0 // pred_region
    _
  $region5: #{model_forward.1} parent=0 // pred_fallthru
    _
  // Predicated region
  $region6: #{model_forward.1} parent=0 // pred_check
    _
  $region7: #{model_forward.1} parent=0 // pred_check_branch
    %11 = sbr.rel (0) target = $region9
  $region8: #{model_forward.1} parent=0 // pred_region
    _
  $region9: #{model_forward.1} parent=0 // pred_fallthru
    _
  // Predicated region
  $region10: #{model_forward.1} parent=0 // pred_check
    _
  $region11: #{model_forward.1} parent=0 // pred_check_branch
    %13 = sbr.rel (0) target = $region13
  $region12: #{model_forward.1} parent=0 // pred_region
    _
  $region13: #{model_forward.1} parent=0 // pred_fallthru
    _
  %v14 = vld [vmem:[%s0] sm:$0xff]
  %v15 = vld [vmem:[%s0 + $0x8] sm:$0xff]
  %v16 = vld [vmem:[%s0 + $0x10] sm:$0xff]
  %v17 = vld [vmem:[%s0 + $0x18] sm:$0xff]
  %v18 = vld [vmem:[%s0 + $0x20] sm:$0xff]
  %v19 = vld [vmem:[%s0 + $0x28] sm:$0xff]
  %v20 = vld [vmem:[%s0 + $0x30] sm:$0xff]
  %v21 = vld [vmem:[%s0 + $0x38] sm:$0xff]
  %v22 = vld [vmem:[%s0 + $0x40] sm:$0xff]
  %v23 = vld [vmem:[%s0 + $0x48] sm:$0xff]
  %v24 = vld [vmem:[%s0 + $0x50] sm:$0xff]
  %v25 = vld [vmem:[%s0 + $0x58] sm:$0xff]
  %v26 = vld [vmem:[%s0 + $0x60] sm:$0xff]
  %v27 = vld [vmem:[%s0 + $0x68] sm:$0xff]
  %v28 = vld [vmem:[%s0 + $0x70] sm:$0xff]
  %v29 = vld [vmem:[%s0 + $0x78] sm:$0xff]
  %v30 = vld [vmem:[%s0 + $0x80] sm:$0xff]
  %v31 = vld [vmem:[%s0 + $0x88] sm:$0xff]
  %v32 = vld [vmem:[%s0 + $0x90] sm:$0xff]
  %v33 = vld [vmem:[%s0 + $0x98] sm:$0xff]
  %v34 = vld [vmem:[%s0 + $0xa0] sm:$0xff]
  %v35 = vld [vmem:[%s0 + $0xa8] sm:$0xff]
  %v36 = vld [vmem:[%s0 + $0xb0] sm:$0xff]
  %v37 = vld [vmem:[%s0 + $0xb8] sm:$0xff]
  %v38 = vld [vmem:[%s0 + $0xc0] sm:$0xff]
  %v39 = vld [vmem:[%s1] sm:$0xff]
  %v40 = vld [vmem:[%s1 + $0x8] sm:$0xff]
  %v41 = vld [vmem:[%s1 + $0x10] sm:$0xff]
  %v42 = vld [vmem:[%s1 + $0x18] sm:$0xff]
  %v43 = vld [vmem:[%s2] sm:$0x1]
  %v45 = vlaneseq
  %v46 = vshrl.u32 %v45, 7
  %v47 = vsub.s32 0, %v46
  %v48 = vrot.slane %v43, %v47
  %vm50 = vcmask 261120
  %v52 = vsel %vm50, %v14, 0
  %v55 = vsel %vm50, %v15, 0
  %v58 = vsel %vm50, %v16, 0
  %v61 = vsel %vm50, %v17, 0
  %v64 = vsel %vm50, %v18, 0
  %v67 = vsel %vm50, %v19, 0
  %v70 = vsel %vm50, %v20, 0
  %v73 = vsel %vm50, %v21, 0
  %v76 = vsel %vm50, %v22, 0
  %v79 = vsel %vm50, %v23, 0
  %v82 = vsel %vm50, %v24, 0
  %v85 = vsel %vm50, %v25, 0
  %v88 = vsel %vm50, %v26, 0
  %v91 = vsel %vm50, %v27, 0
  %v94 = vsel %vm50, %v28, 0
  %v97 = vsel %vm50, %v29, 0
  %v100 = vsel %vm50, %v30, 0
  %v103 = vsel %vm50, %v31, 0
  %v106 = vsel %vm50, %v32, 0
  %v109 = vsel %vm50, %v33, 0
  %v112 = vsel %vm50, %v34, 0
  %v115 = vsel %vm50, %v35, 0
  %v118 = vsel %vm50, %v36, 0
  %v121 = vsel %vm50, %v37, 0
  %v124 = vsel %vm50, %v38, 0
  %126 = vmatprep.subr.mxu0 0.0
  %127 = vmatpush1.msra.mxu0 0.0
  %128 = vmatprep.subr.mxu0 0.0
  %129 = vmatpush1.msra.mxu0 0.0
  %130 = vmatprep.subr.mxu0 0.0
  %131 = vmatpush1.msra.mxu0 0.0
  %132 = vmatprep.subr.mxu0 0.0
  %133 = vmatpush1.msra.mxu0 0.0
  %134 = vmatprep.subr.mxu0 0.0
  %135 = vmatpush1.msra.mxu0 0.0
  %136 = vmatprep.subr.mxu0 0.0
  %137 = vmatpush1.msra.mxu0 0.0
  %138 = vmatprep.subr.mxu0 0.0
  %139 = vmatpush1.msra.mxu0 0.0
  %140 = vmatprep.subr.mxu0 0.0
  %141 = vmatpush1.msra.mxu0 0.0
  %142 = vmatprep.subr.mxu0 0.0
  %143 = vmatpush1.msra.mxu0 0.0
  %144 = vmatprep.subr.mxu0 0.0
  %145 = vmatpush1.msra.mxu0 0.0
  %146 = vmatprep.subr.mxu0 0.0
  %147 = vmatpush1.msra.mxu0 0.0
  %148 = vmatprep.subr.mxu0 0.0
  %149 = vmatpush1.msra.mxu0 0.0
  %150 = vmatprep.subr.mxu0 0.0
  %151 = vmatpush1.msra.mxu0 %v42
  %152 = vmatprep.subr.mxu0 0.0
  %153 = vmatpush1.msra.mxu0 %v41
  %154 = vmatprep.subr.mxu0 0.0
  %155 = vmatpush1.msra.mxu0 %v40
  %156 = vmatprep.subr.mxu0 0.0
  %157 = vmatpush1.msra.mxu0 %v39
  %158 = vmatprep.subr.mxu0 0.0
  %159 = vmatpush2.msra.mxu0 0.0
  %160 = vmatprep.subr.mxu0 0.0
  %161 = vmatpush2.msra.mxu0 0.0
  %162 = vmatprep.subr.mxu0 0.0
  %163 = vmatpush2.msra.mxu0 0.0
  %164 = vmatprep.subr.mxu0 0.0
  %165 = vmatpush2.msra.mxu0 0.0
  %166 = vmatprep.subr.mxu0 0.0
  %167 = vmatpush2.msra.mxu0 0.0
  %168 = vmatprep.subr.mxu0 0.0
  %169 = vmatpush2.msra.mxu0 0.0
  %170 = vmatprep.subr.mxu0 0.0
  %171 = vmatpush2.msra.mxu0 0.0
  %172 = vmatprep.subr.mxu0 0.0
  %173 = vmatpush2.msra.mxu0 0.0
  %174 = vmatprep.subr.mxu0 0.0
  %175 = vmatpush2.msra.mxu0 0.0
  %176 = vmatprep.subr.mxu0 0.0
  %177 = vmatpush2.msra.mxu0 0.0
  %178 = vmatprep.subr.mxu0 0.0
  %179 = vmatpush2.msra.mxu0 0.0
  %180 = vmatprep.subr.mxu0 0.0
  %181 = vmatpush2.msra.mxu0 0.0
  %182 = vmatprep.subr.mxu0 0.0
  %183 = vmatpush2.msra.mxu0 0.0
  %184 = vmatprep.subr.mxu0 0.0
  %185 = vmatpush2.msra.mxu0 0.0
  %186 = vmatprep.subr.mxu0 0.0
  %187 = vmatpush2.msra.mxu0 0.0
  %188 = vmatprep.subr.mxu0 0.0
  %189 = vmatpush2.msra.mxu0 0.0
  %190 = vmatprep.mubr.f32.mxu0 0.0
  %191 = vmatmul.mubr.f32.gmra.mxu0 %v52
  %v192 = vpop.f32.mrf.mxu0
  %v193 = vadd.f32 %v48, %v192
  %v194 = vpop.f32.mrf.mxu0
  %195 = vmatprep.mubr.f32.mxu0 0.0
  %196 = vmatmul.mubr.f32.gmra.mxu0 %v55
  %v197 = vpop.f32.mrf.mxu0
  %v198 = vadd.f32 %v48, %v197
  %v199 = vpop.f32.mrf.mxu0
  %200 = vmatprep.mubr.f32.mxu0 0.0
  %201 = vmatmul.mubr.f32.gmra.mxu0 %v58
  %v202 = vpop.f32.mrf.mxu0
  %v203 = vadd.f32 %v48, %v202
  %v204 = vpop.f32.mrf.mxu0
  %205 = vmatprep.mubr.f32.mxu0 0.0
  %206 = vmatmul.mubr.f32.gmra.mxu0 %v61
  %v207 = vpop.f32.mrf.mxu0
  %v208 = vadd.f32 %v48, %v207
  %v209 = vpop.f32.mrf.mxu0
  %210 = vmatprep.mubr.f32.mxu0 0.0
  %211 = vmatmul.mubr.f32.gmra.mxu0 %v64
  %v212 = vpop.f32.mrf.mxu0
  %v213 = vadd.f32 %v48, %v212
  %v214 = vpop.f32.mrf.mxu0
  %215 = vmatprep.mubr.f32.mxu0 0.0
  %216 = vmatmul.mubr.f32.gmra.mxu0 %v67
  %v217 = vpop.f32.mrf.mxu0
  %v218 = vadd.f32 %v48, %v217
  %v219 = vpop.f32.mrf.mxu0
  %220 = vmatprep.mubr.f32.mxu0 0.0
  %221 = vmatmul.mubr.f32.gmra.mxu0 %v70
  %v222 = vpop.f32.mrf.mxu0
  %v223 = vadd.f32 %v48, %v222
  %v224 = vpop.f32.mrf.mxu0
  %225 = vmatprep.mubr.f32.mxu0 0.0
  %226 = vmatmul.mubr.f32.gmra.mxu0 %v73
  %v227 = vpop.f32.mrf.mxu0
  %v228 = vadd.f32 %v48, %v227
  %v229 = vpop.f32.mrf.mxu0
  %230 = vmatprep.mubr.f32.mxu0 0.0
  %231 = vmatmul.mubr.f32.gmra.mxu0 %v76
  %v232 = vpop.f32.mrf.mxu0
  %v233 = vadd.f32 %v48, %v232
  %v234 = vpop.f32.mrf.mxu0
  %235 = vmatprep.mubr.f32.mxu0 0.0
  %236 = vmatmul.mubr.f32.gmra.mxu0 %v79
  %v237 = vpop.f32.mrf.mxu0
  %v238 = vadd.f32 %v48, %v237
  %v239 = vpop.f32.mrf.mxu0
  %240 = vmatprep.mubr.f32.mxu0 0.0
  %241 = vmatmul.mubr.f32.gmra.mxu0 %v82
  %v242 = vpop.f32.mrf.mxu0
  %v243 = vadd.f32 %v48, %v242
  %v244 = vpop.f32.mrf.mxu0
  %245 = vmatprep.mubr.f32.mxu0 0.0
  %246 = vmatmul.mubr.f32.gmra.mxu0 %v85
  %v247 = vpop.f32.mrf.mxu0
  %v248 = vadd.f32 %v48, %v247
  %v249 = vpop.f32.mrf.mxu0
  %250 = vmatprep.mubr.f32.mxu0 0.0
  %251 = vmatmul.mubr.f32.gmra.mxu0 %v88
  %v252 = vpop.f32.mrf.mxu0
  %v253 = vadd.f32 %v48, %v252
  %v254 = vpop.f32.mrf.mxu0
  %255 = vmatprep.mubr.f32.mxu0 0.0
  %256 = vmatmul.mubr.f32.gmra.mxu0 %v91
  %v257 = vpop.f32.mrf.mxu0
  %v258 = vadd.f32 %v48, %v257
  %v259 = vpop.f32.mrf.mxu0
  %260 = vmatprep.mubr.f32.mxu0 0.0
  %261 = vmatmul.mubr.f32.gmra.mxu0 %v94
  %v262 = vpop.f32.mrf.mxu0
  %v263 = vadd.f32 %v48, %v262
  %v264 = vpop.f32.mrf.mxu0
  %265 = vmatprep.mubr.f32.mxu0 0.0
  %266 = vmatmul.mubr.f32.gmra.mxu0 %v97
  %v267 = vpop.f32.mrf.mxu0
  %v268 = vadd.f32 %v48, %v267
  %v269 = vpop.f32.mrf.mxu0
  %270 = vmatprep.mubr.f32.mxu0 0.0
  %271 = vmatmul.mubr.f32.gmra.mxu0 %v100
  %v272 = vpop.f32.mrf.mxu0
  %v273 = vadd.f32 %v48, %v272
  %v274 = vpop.f32.mrf.mxu0
  %275 = vmatprep.mubr.f32.mxu0 0.0
  %276 = vmatmul.mubr.f32.gmra.mxu0 %v103
  %v277 = vpop.f32.mrf.mxu0
  %v278 = vadd.f32 %v48, %v277
  %v279 = vpop.f32.mrf.mxu0
  %280 = vmatprep.mubr.f32.mxu0 0.0
  %281 = vmatmul.mubr.f32.gmra.mxu0 %v106
  %v282 = vpop.f32.mrf.mxu0
  %v283 = vadd.f32 %v48, %v282
  %v284 = vpop.f32.mrf.mxu0
  %285 = vmatprep.mubr.f32.mxu0 0.0
  %286 = vmatmul.mubr.f32.gmra.mxu0 %v109
  %v287 = vpop.f32.mrf.mxu0
  %v288 = vadd.f32 %v48, %v287
  %v289 = vpop.f32.mrf.mxu0
  %290 = vmatprep.mubr.f32.mxu0 0.0
  %291 = vmatmul.mubr.f32.gmra.mxu0 %v112
  %v292 = vpop.f32.mrf.mxu0
  %v293 = vadd.f32 %v48, %v292
  %v294 = vpop.f32.mrf.mxu0
  %295 = vmatprep.mubr.f32.mxu0 0.0
  %296 = vmatmul.mubr.f32.gmra.mxu0 %v115
  %v297 = vpop.f32.mrf.mxu0
  %v298 = vadd.f32 %v48, %v297
  %v299 = vpop.f32.mrf.mxu0
  %300 = vmatprep.mubr.f32.mxu0 0.0
  %301 = vmatmul.mubr.f32.gmra.mxu0 %v118
  %v302 = vpop.f32.mrf.mxu0
  %v303 = vadd.f32 %v48, %v302
  %v304 = vpop.f32.mrf.mxu0
  %305 = vmatprep.mubr.f32.mxu0 0.0
  %306 = vmatmul.mubr.f32.gmra.mxu0 %v121
  %v307 = vpop.f32.mrf.mxu0
  %v308 = vadd.f32 %v48, %v307
  %v309 = vpop.f32.mrf.mxu0
  %310 = vmatprep.mubr.f32.mxu0 0.0
  %311 = vmatmul.mubr.f32.gmra.mxu0 %v124
  %v312 = vpop.f32.mrf.mxu0
  %v313 = vadd.f32 %v48, %v312
  %v314 = vpop.f32.mrf.mxu0
  %315 = vdwg.mxu0
  %v316 = vmax.f32 %v14, 0.0
  %v317 = vmax.f32 %v15, 0.0
  %v318 = vmax.f32 %v16, 0.0
  %v319 = vmax.f32 %v17, 0.0
  %v320 = vmax.f32 %v18, 0.0
  %v321 = vmax.f32 %v19, 0.0
  %v322 = vmax.f32 %v20, 0.0
  %v323 = vmax.f32 %v21, 0.0
  %v324 = vmax.f32 %v22, 0.0
  %v325 = vmax.f32 %v23, 0.0
  %v326 = vmax.f32 %v24, 0.0
  %v327 = vmax.f32 %v25, 0.0
  %v328 = vmax.f32 %v26, 0.0
  %v329 = vmax.f32 %v27, 0.0
  %v330 = vmax.f32 %v28, 0.0
  %v331 = vmax.f32 %v29, 0.0
  %v332 = vmax.f32 %v30, 0.0
  %v333 = vmax.f32 %v31, 0.0
  %v334 = vmax.f32 %v32, 0.0
  %v335 = vmax.f32 %v33, 0.0
  %v336 = vmax.f32 %v34, 0.0
  %v337 = vmax.f32 %v35, 0.0
  %v338 = vmax.f32 %v36, 0.0
  %v339 = vmax.f32 %v37, 0.0
  %v340 = vmax.f32 %v38, 0.0
  %366 = vrot.lane.b32.xlu0 %v316, 116
  %v367 = vpop.permute.xlu0 %366
  %368 = vrot.lane.b32.xlu0 %v317, 116
  %v369 = vpop.permute.xlu0 %368
  %370 = vrot.lane.b32.xlu0 %v318, 116
  %v371 = vpop.permute.xlu0 %370
  %372 = vrot.lane.b32.xlu0 %v319, 116
  %v373 = vpop.permute.xlu0 %372
  %374 = vrot.lane.b32.xlu0 %v320, 116
  %v375 = vpop.permute.xlu0 %374
  %376 = vrot.lane.b32.xlu0 %v321, 116
  %v377 = vpop.permute.xlu0 %376
  %378 = vrot.lane.b32.xlu0 %v322, 116
  %v379 = vpop.permute.xlu0 %378
  %380 = vrot.lane.b32.xlu0 %v323, 116
  %v381 = vpop.permute.xlu0 %380
  %382 = vrot.lane.b32.xlu0 %v324, 116
  %v383 = vpop.permute.xlu0 %382
  %384 = vrot.lane.b32.xlu0 %v325, 116
  %v385 = vpop.permute.xlu0 %384
  %386 = vrot.lane.b32.xlu0 %v326, 116
  %v387 = vpop.permute.xlu0 %386
  %388 = vrot.lane.b32.xlu0 %v327, 116
  %v389 = vpop.permute.xlu0 %388
  %390 = vrot.lane.b32.xlu0 %v328, 116
  %v391 = vpop.permute.xlu0 %390
  %392 = vrot.lane.b32.xlu0 %v329, 116
  %v393 = vpop.permute.xlu0 %392
  %394 = vrot.lane.b32.xlu0 %v330, 116
  %v395 = vpop.permute.xlu0 %394
  %396 = vrot.lane.b32.xlu0 %v331, 116
  %v397 = vpop.permute.xlu0 %396
  %398 = vrot.lane.b32.xlu0 %v332, 116
  %v399 = vpop.permute.xlu0 %398
  %400 = vrot.lane.b32.xlu0 %v333, 116
  %v401 = vpop.permute.xlu0 %400
  %402 = vrot.lane.b32.xlu0 %v334, 116
  %v403 = vpop.permute.xlu0 %402
  %404 = vrot.lane.b32.xlu0 %v335, 116
  %v405 = vpop.permute.xlu0 %404
  %406 = vrot.lane.b32.xlu0 %v336, 116
  %v407 = vpop.permute.xlu0 %406
  %408 = vrot.lane.b32.xlu0 %v337, 116
  %v409 = vpop.permute.xlu0 %408
  %410 = vrot.lane.b32.xlu0 %v338, 116
  %v411 = vpop.permute.xlu0 %410
  %412 = vrot.lane.b32.xlu0 %v339, 116
  %v413 = vpop.permute.xlu0 %412
  %414 = vrot.lane.b32.xlu0 %v340, 116
  %v415 = vpop.permute.xlu0 %414
  %vm441 = vcmask 23552
  %v442 = vsel %vm441, %v367, 0.0
  %443 = vadd.xlane.f32.xlu0 %v442
  %v444 = vpop.xlane.xlu0 %443
  %v445 = vsel %vm441, %v369, 0.0
  %446 = vadd.xlane.f32.xlu0 %v445
  %v447 = vpop.xlane.xlu0 %446
  %v448 = vsel %vm441, %v371, 0.0
  %449 = vadd.xlane.f32.xlu0 %v448
  %v450 = vpop.xlane.xlu0 %449
  %v451 = vsel %vm441, %v373, 0.0
  %452 = vadd.xlane.f32.xlu0 %v451
  %v453 = vpop.xlane.xlu0 %452
  %v454 = vsel %vm441, %v375, 0.0
  %455 = vadd.xlane.f32.xlu0 %v454
  %v456 = vpop.xlane.xlu0 %455
  %v457 = vsel %vm441, %v377, 0.0
  %458 = vadd.xlane.f32.xlu0 %v457
  %v459 = vpop.xlane.xlu0 %458
  %v460 = vsel %vm441, %v379, 0.0
  %461 = vadd.xlane.f32.xlu0 %v460
  %v462 = vpop.xlane.xlu0 %461
  %v463 = vsel %vm441, %v381, 0.0
  %464 = vadd.xlane.f32.xlu0 %v463
  %v465 = vpop.xlane.xlu0 %464
  %v466 = vsel %vm441, %v383, 0.0
  %467 = vadd.xlane.f32.xlu0 %v466
  %v468 = vpop.xlane.xlu0 %467
  %v469 = vsel %vm441, %v385, 0.0
  %470 = vadd.xlane.f32.xlu0 %v469
  %v471 = vpop.xlane.xlu0 %470
  %v472 = vsel %vm441, %v387, 0.0
  %473 = vadd.xlane.f32.xlu0 %v472
  %v474 = vpop.xlane.xlu0 %473
  %v475 = vsel %vm441, %v389, 0.0
  %476 = vadd.xlane.f32.xlu0 %v475
  %v477 = vpop.xlane.xlu0 %476
  %v478 = vsel %vm441, %v391, 0.0
  %479 = vadd.xlane.f32.xlu0 %v478
  %v480 = vpop.xlane.xlu0 %479
  %v481 = vsel %vm441, %v393, 0.0
  %482 = vadd.xlane.f32.xlu0 %v481
  %v483 = vpop.xlane.xlu0 %482
  %v484 = vsel %vm441, %v395, 0.0
  %485 = vadd.xlane.f32.xlu0 %v484
  %v486 = vpop.xlane.xlu0 %485
  %v487 = vsel %vm441, %v397, 0.0
  %488 = vadd.xlane.f32.xlu0 %v487
  %v489 = vpop.xlane.xlu0 %488
  %v490 = vsel %vm441, %v399, 0.0
  %491 = vadd.xlane.f32.xlu0 %v490
  %v492 = vpop.xlane.xlu0 %491
  %v493 = vsel %vm441, %v401, 0.0
  %494 = vadd.xlane.f32.xlu0 %v493
  %v495 = vpop.xlane.xlu0 %494
  %v496 = vsel %vm441, %v403, 0.0
  %497 = vadd.xlane.f32.xlu0 %v496
  %v498 = vpop.xlane.xlu0 %497
  %v499 = vsel %vm441, %v405, 0.0
  %500 = vadd.xlane.f32.xlu0 %v499
  %v501 = vpop.xlane.xlu0 %500
  %v502 = vsel %vm441, %v407, 0.0
  %503 = vadd.xlane.f32.xlu0 %v502
  %v504 = vpop.xlane.xlu0 %503
  %v505 = vsel %vm441, %v409, 0.0
  %506 = vadd.xlane.f32.xlu0 %v505
  %v507 = vpop.xlane.xlu0 %506
  %v508 = vsel %vm441, %v411, 0.0
  %509 = vadd.xlane.f32.xlu0 %v508
  %v510 = vpop.xlane.xlu0 %509
  %v511 = vsel %vm441, %v413, 0.0
  %512 = vadd.xlane.f32.xlu0 %v511
  %v513 = vpop.xlane.xlu0 %512
  %v514 = vsel %vm441, %v415, 0.0
  %515 = vadd.xlane.f32.xlu0 %v514
  %v516 = vpop.xlane.xlu0 %515
  %v517 = vmul.f32 %v444, 0.33333334
  %v518 = vmul.f32 %v447, 0.33333334
  %v519 = vmul.f32 %v450, 0.33333334
  %v520 = vmul.f32 %v453, 0.33333334
  %v521 = vmul.f32 %v456, 0.33333334
  %v522 = vmul.f32 %v459, 0.33333334
  %v523 = vmul.f32 %v462, 0.33333334
  %v524 = vmul.f32 %v465, 0.33333334
  %v525 = vmul.f32 %v468, 0.33333334
  %v526 = vmul.f32 %v471, 0.33333334
  %v527 = vmul.f32 %v474, 0.33333334
  %v528 = vmul.f32 %v477, 0.33333334
  %v529 = vmul.f32 %v480, 0.33333334
  %v530 = vmul.f32 %v483, 0.33333334
  %v531 = vmul.f32 %v486, 0.33333334
  %v532 = vmul.f32 %v489, 0.33333334
  %v533 = vmul.f32 %v492, 0.33333334
  %v534 = vmul.f32 %v495, 0.33333334
  %v535 = vmul.f32 %v498, 0.33333334
  %v536 = vmul.f32 %v501, 0.33333334
  %v537 = vmul.f32 %v504, 0.33333334
  %v538 = vmul.f32 %v507, 0.33333334
  %v539 = vmul.f32 %v510, 0.33333334
  %v540 = vmul.f32 %v513, 0.33333334
  %v541 = vmul.f32 %v516, 0.33333334
  %v542 = vmul.f32 %v193, %v517
  %v543 = vmul.f32 %v198, %v518
  %v544 = vmul.f32 %v203, %v519
  %v545 = vmul.f32 %v208, %v520
  %v546 = vmul.f32 %v213, %v521
  %v547 = vmul.f32 %v218, %v522
  %v548 = vmul.f32 %v223, %v523
  %v549 = vmul.f32 %v228, %v524
  %v550 = vmul.f32 %v233, %v525
  %v551 = vmul.f32 %v238, %v526
  %v552 = vmul.f32 %v243, %v527
  %v553 = vmul.f32 %v248, %v528
  %v554 = vmul.f32 %v253, %v529
  %v555 = vmul.f32 %v258, %v530
  %v556 = vmul.f32 %v263, %v531
  %v557 = vmul.f32 %v268, %v532
  %v558 = vmul.f32 %v273, %v533
  %v559 = vmul.f32 %v278, %v534
  %v560 = vmul.f32 %v283, %v535
  %v561 = vmul.f32 %v288, %v536
  %v562 = vmul.f32 %v293, %v537
  %v563 = vmul.f32 %v298, %v538
  %v564 = vmul.f32 %v303, %v539
  %v565 = vmul.f32 %v308, %v540
  %v566 = vmul.f32 %v313, %v541
  %vm567 = vcmp.lt.f32.partialorder %v542, 5.0
  %vm568 = vcmp.lt.f32.partialorder %v543, 5.0
  %vm569 = vcmp.lt.f32.partialorder %v544, 5.0
  %vm570 = vcmp.lt.f32.partialorder %v545, 5.0
  %vm571 = vcmp.lt.f32.partialorder %v546, 5.0
  %vm572 = vcmp.lt.f32.partialorder %v547, 5.0
  %vm573 = vcmp.lt.f32.partialorder %v548, 5.0
  %vm574 = vcmp.lt.f32.partialorder %v549, 5.0
  %vm575 = vcmp.lt.f32.partialorder %v550, 5.0
  %vm576 = vcmp.lt.f32.partialorder %v551, 5.0
  %vm577 = vcmp.lt.f32.partialorder %v552, 5.0
  %vm578 = vcmp.lt.f32.partialorder %v553, 5.0
  %vm579 = vcmp.lt.f32.partialorder %v554, 5.0
  %vm580 = vcmp.lt.f32.partialorder %v555, 5.0
  %vm581 = vcmp.lt.f32.partialorder %v556, 5.0
  %vm582 = vcmp.lt.f32.partialorder %v557, 5.0
  %vm583 = vcmp.lt.f32.partialorder %v558, 5.0
  %vm584 = vcmp.lt.f32.partialorder %v559, 5.0
  %vm585 = vcmp.lt.f32.partialorder %v560, 5.0
  %vm586 = vcmp.lt.f32.partialorder %v561, 5.0
  %vm587 = vcmp.lt.f32.partialorder %v562, 5.0
  %vm588 = vcmp.lt.f32.partialorder %v563, 5.0
  %vm589 = vcmp.lt.f32.partialorder %v564, 5.0
  %vm590 = vcmp.lt.f32.partialorder %v565, 5.0
  %vm591 = vcmp.lt.f32.partialorder %v566, 5.0
  %v592 = vsel %vm567, %v542, 0.0
  %v593 = vsel %vm568, %v543, 0.0
  %v594 = vsel %vm569, %v544, 0.0
  %v595 = vsel %vm570, %v545, 0.0
  %v596 = vsel %vm571, %v546, 0.0
  %v597 = vsel %vm572, %v547, 0.0
  %v598 = vsel %vm573, %v548, 0.0
  %v599 = vsel %vm574, %v549, 0.0
  %v600 = vsel %vm575, %v550, 0.0
  %v601 = vsel %vm576, %v551, 0.0
  %v602 = vsel %vm577, %v552, 0.0
  %v603 = vsel %vm578, %v553, 0.0
  %v604 = vsel %vm579, %v554, 0.0
  %v605 = vsel %vm580, %v555, 0.0
  %v606 = vsel %vm581, %v556, 0.0
  %v607 = vsel %vm582, %v557, 0.0
  %v608 = vsel %vm583, %v558, 0.0
  %v609 = vsel %vm584, %v559, 0.0
  %v610 = vsel %vm585, %v560, 0.0
  %v611 = vsel %vm586, %v561, 0.0
  %v612 = vsel %vm587, %v562, 0.0
  %v613 = vsel %vm588, %v563, 0.0
  %v614 = vsel %vm589, %v564, 0.0
  %v615 = vsel %vm590, %v565, 0.0
  %v616 = vsel %vm591, %v566, 0.0
  %617 = vst [vmem:[%s3] sm:$0xff] %v592
  %618 = vst [vmem:[%s3 + $0x8] sm:$0xff] %v593
  %619 = vst [vmem:[%s3 + $0x10] sm:$0xff] %v594
  %620 = vst [vmem:[%s3 + $0x18] sm:$0xff] %v595
  %621 = vst [vmem:[%s3 + $0x20] sm:$0xff] %v596
  %622 = vst [vmem:[%s3 + $0x28] sm:$0xff] %v597
  %623 = vst [vmem:[%s3 + $0x30] sm:$0xff] %v598
  %624 = vst [vmem:[%s3 + $0x38] sm:$0xff] %v599
  %625 = vst [vmem:[%s3 + $0x40] sm:$0xff] %v600
  %626 = vst [vmem:[%s3 + $0x48] sm:$0xff] %v601
  %627 = vst [vmem:[%s3 + $0x50] sm:$0xff] %v602
  %628 = vst [vmem:[%s3 + $0x58] sm:$0xff] %v603
  %629 = vst [vmem:[%s3 + $0x60] sm:$0xff] %v604
  %630 = vst [vmem:[%s3 + $0x68] sm:$0xff] %v605
  %631 = vst [vmem:[%s3 + $0x70] sm:$0xff] %v606
  %632 = vst [vmem:[%s3 + $0x78] sm:$0xff] %v607
  %633 = vst [vmem:[%s3 + $0x80] sm:$0xff] %v608
  %634 = vst [vmem:[%s3 + $0x88] sm:$0xff] %v609
  %635 = vst [vmem:[%s3 + $0x90] sm:$0xff] %v610
  %636 = vst [vmem:[%s3 + $0x98] sm:$0xff] %v611
  %637 = vst [vmem:[%s3 + $0xa0] sm:$0xff] %v612
  %638 = vst [vmem:[%s3 + $0xa8] sm:$0xff] %v613
  %639 = vst [vmem:[%s3 + $0xb0] sm:$0xff] %v614
  %640 = vst [vmem:[%s3 + $0xb8] sm:$0xff] %v615
  %641 = vst [vmem:[%s3 + $0xc0] sm:$0xff] %v616
  // Predicated region
  $region14: #{model_forward.1} parent=0 // pred_check
    _
  $region15: #{model_forward.1} parent=0 // pred_check_branch
    %643 = sbr.rel (0) target = $region17
  $region16: #{model_forward.1} parent=0 // pred_region
    _
  $region17: #{model_forward.1} parent=0 // pred_fallthru
    _
  // Predicated region
  $region18: #{model_forward.1} parent=0 // pred_check
    _
  $region19: #{model_forward.1} parent=0 // pred_check_branch
    %645 = sbr.rel (0) target = $region21
  $region20: #{model_forward.1} parent=0 // pred_region
    _
  $region21: #{model_forward.1} parent=0 // pred_fallthru
    _

</llo_original>
